<compile_context>
chip_gen: v7x
topology: tpu7x:2x2x1
jax: 0.10.0
libtpu: 0.0.40
codegen_flags: <defaults>
</compile_context>

<pallas_src>
import functools

import jax
import jax.numpy as jnp
from jax.experimental import pallas as pl
from jax.experimental.pallas import tpu as pltpu


# ------------------------------ helpers -------------------------------------

def _round_up(x, m):
    return ((x + m - 1) // m) * m


def _sigmoid_tanh(z):
    # sigmoid(x) == 0.5 * tanh(0.5 x) + 0.5 : one EUP op instead of exp+recip.
    return 0.5 * jnp.tanh(0.5 * z) + 0.5


# ------------------------------ fused kernel --------------------------------

def _decoder_step_kernel(x0_ref,                    # VMEM (B_pad, D)  embedded input (resident)
                         h_in_ref, c_in_ref,        # VMEM (B_pad, D)  state of layer l (f32)
                         w_ref,                     # VMEM (2D, 4D)    fused [Wih; Whh] (bf16, layer l)
                         b_ref,                     # VMEM (1, 4D)     fused bias (f32, layer l)
                         fcw_ref, fcb_ref,          # VMEM (D, V_pad) bf16, (1, V_pad) f32 (resident)
                         pred_ref,                  # VMEM (B_pad, V_pad) f32 (resident output)
                         h_out_ref, c_out_ref,      # VMEM (B_pad, D) f32 (layer l)
                         x_scr,                     # VMEM (B_pad, D) f32 scratch (inter-layer act.)
                         *, d_pad):
    l = pl.program_id(0)
    n_layers = pl.num_programs(0)

    # ---- layer 0: the embedded token (gathered in the wrapper) seeds x ------
    @pl.when(l == 0)
    def _():
        x_scr[...] = x0_ref[...]

    x = x_scr[...]                                   # (B_pad, D) f32
    h_prev = h_in_ref[...]                           # (B_pad, D) f32
    c_prev = c_in_ref[...]                           # (B_pad, D) f32

    # ---- single fused gate matmul (bf16 operands, f32 accumulation) ---------
    xh = jnp.concatenate([x, h_prev], axis=-1).astype(jnp.bfloat16)   # (B_pad, 2D)
    gates = (jnp.dot(xh, w_ref[...], preferred_element_type=jnp.float32)
             + b_ref[...])                           # (B_pad, 4D) f32

    d = d_pad                                        # lane-aligned per-gate slices
    i = _sigmoid_tanh(gates[:, 0 * d:1 * d])
    f = _sigmoid_tanh(gates[:, 1 * d:2 * d])
    g = jnp.tanh(gates[:, 2 * d:3 * d])
    o = _sigmoid_tanh(gates[:, 3 * d:4 * d])

    c_new = f * c_prev + i * g
    h_new = o * jnp.tanh(c_new)

    h_out_ref[...] = h_new
    c_out_ref[...] = c_new

    # feed the next layer (skip the dead store on the last layer)
    @pl.when(l < n_layers - 1)
    def _():
        x_scr[...] = h_new

    # ---- last layer: fused FC head -------------------------------------------
    @pl.when(l == n_layers - 1)
    def _():
        pred_ref[...] = (jnp.dot(h_new.astype(jnp.bfloat16), fcw_ref[...],
                                 preferred_element_type=jnp.float32)
                         + fcb_ref[...])


# --------------------------- parameter packing -------------------------------

def init_decoder_params(key, output_dim, emb_dim, hid_dim, n_layers):
    """Raw (PyTorch-layout) parameters."""
    params = {}
    k = 1.0 / jnp.sqrt(jnp.float32(hid_dim))
    key, sub = jax.random.split(key)
    params["emb"] = jax.random.normal(sub, (output_dim, emb_dim), jnp.float32)
    layers = []
    for layer in range(n_layers):
        in_dim = emb_dim if layer == 0 else hid_dim
        key, k1, k2, k3, k4 = jax.random.split(key, 5)
        wih = jax.random.uniform(k1, (4 * hid_dim, in_dim), jnp.float32, -k, k)
        whh = jax.random.uniform(k2, (4 * hid_dim, hid_dim), jnp.float32, -k, k)
        bih = jax.random.uniform(k3, (4 * hid_dim,), jnp.float32, -k, k)
        bhh = jax.random.uniform(k4, (4 * hid_dim,), jnp.float32, -k, k)
        layers.append({
            "wih_t": wih.T,                   # (in_dim, 4H)  gate order [i,f,g,o]
            "whh_t": whh.T,                   # (H, 4H)
            "bias": (bih + bhh)[None, :],     # (1, 4H)
        })
    params["layers"] = layers
    key, k5, k6 = jax.random.split(key, 3)
    fc_w = jax.random.uniform(k5, (output_dim, hid_dim), jnp.float32, -k, k)
    fc_b = jax.random.uniform(k6, (output_dim,), jnp.float32, -k, k)
    params["fc_w_t"] = fc_w.T                 # (H, V)
    params["fc_b"] = fc_b[None, :]            # (1, V)
    return params


def pack_decoder_params(params, *, lane=128):
    """One-time repack: pad to (8,128)-friendly shapes, fuse+stack per-layer
    weights, cast streamed matmul weights to bf16."""
    V, E = params["emb"].shape
    H = params["layers"][0]["whh_t"].shape[0]
    # Common padded width for x / h / c AND per-gate columns (fixes the
    # H_pad != D_pad shape bug: gate slices always match the state width).
    D = _round_up(max(E, H), lane)
    V_pad = _round_up(V, lane)

    def pad_gate_cols(w):                     # (..., 4H) -> (..., 4*D), per gate
        parts = jnp.split(w, 4, axis=-1)
        pad = [(0, 0)] * (w.ndim - 1) + [(0, D - H)]
        return jnp.concatenate([jnp.pad(p, pad) for p in parts], axis=-1)

    w_fused, bias = [], []
    for p in params["layers"]:
        wih = pad_gate_cols(p["wih_t"])                          # (in_dim, 4D)
        wih = jnp.pad(wih, ((0, D - wih.shape[0]), (0, 0)))      # (D, 4D)
        whh = pad_gate_cols(p["whh_t"])                          # (H, 4D)
        whh = jnp.pad(whh, ((0, D - H), (0, 0)))                 # (D, 4D)
        w_fused.append(jnp.concatenate([wih, whh], axis=0))      # (2D, 4D)
        bias.append(pad_gate_cols(p["bias"]))                    # (1, 4D)

    return {
        "emb": jnp.pad(params["emb"], ((0, 0), (0, D - E))),                   # (V, D) f32
        "w": jnp.stack(w_fused).astype(jnp.bfloat16),                          # (L, 2D, 4D) bf16
        "bias": jnp.stack(bias),                                               # (L, 1, 4D) f32
        "fc_w": jnp.pad(params["fc_w_t"],
                        ((0, D - H), (0, V_pad - V))).astype(jnp.bfloat16),    # (D, V_pad) bf16
        "fc_b": jnp.pad(params["fc_b"], ((0, 0), (0, V_pad - V))),             # (1, V_pad) f32
    }


# ------------------------------ forward --------------------------------------

@jax.jit
def decoder_forward(packed, input_ids, hidden):
    """Mirrors Decoder.forward(input, hidden) for a single decoding step.

    input_ids: (B,) int token ids
    hidden:    (h, c), each (n_layers, B, H)
    returns:   prediction (B, V), (h_new, c_new)
    """
    h, c = hidden
    n_layers, B, H = h.shape
    V, D = packed["emb"].shape
    G = packed["w"].shape[-1]          # 4 * D
    V_pad = packed["fc_w"].shape[-1]
    B_pad = max(8, _round_up(B, 8))

    ids = input_ids.astype(jnp.int32)
    # Embedding gather in the wrapper (per perf review: no per-row DMAs).
    x0 = packed["emb"][ids]                                        # (B, D) f32
    x0_p = jnp.pad(x0, ((0, B_pad - B), (0, 0)))                   # (B_pad, D)
    h_p = jnp.pad(h.astype(jnp.float32), ((0, 0), (0, B_pad - B), (0, D - H)))
    c_p = jnp.pad(c.astype(jnp.float32), ((0, 0), (0, B_pad - B), (0, D - H)))

    kernel = functools.partial(_decoder_step_kernel, d_pad=D)

    grid_spec = pltpu.PrefetchScalarGridSpec(
        num_scalar_prefetch=0,
        grid=(n_layers,),
        in_specs=[
            pl.BlockSpec((B_pad, D), lambda l: (0, 0)),             # x0 (resident)
            pl.BlockSpec((None, B_pad, D), lambda l: (l, 0, 0)),    # h_in  (layer l)
            pl.BlockSpec((None, B_pad, D), lambda l: (l, 0, 0)),    # c_in  (layer l)
            pl.BlockSpec((None, 2 * D, G), lambda l: (l, 0, 0)),    # fused [Wih;Whh] (layer l)
            pl.BlockSpec((None, 1, G), lambda l: (l, 0, 0)),        # bias  (layer l)
            pl.BlockSpec((D, V_pad), lambda l: (0, 0)),             # fc_w (resident)
            pl.BlockSpec((1, V_pad), lambda l: (0, 0)),             # fc_b (resident)
        ],
        out_specs=[
            pl.BlockSpec((B_pad, V_pad), lambda l: (0, 0)),         # prediction
            pl.BlockSpec((None, B_pad, D), lambda l: (l, 0, 0)),    # h_new (layer l)
            pl.BlockSpec((None, B_pad, D), lambda l: (l, 0, 0)),    # c_new (layer l)
        ],
        scratch_shapes=[
            pltpu.VMEM((B_pad, D), jnp.float32),                    # inter-layer activation x
        ],
    )

    pred_p, h_out_p, c_out_p = pl.pallas_call(
        kernel,
        out_shape=(
            jax.ShapeDtypeStruct((B_pad, V_pad), jnp.float32),
            jax.ShapeDtypeStruct((n_layers, B_pad, D), jnp.float32),
            jax.ShapeDtypeStruct((n_layers, B_pad, D), jnp.float32),
        ),
        grid_spec=grid_spec,
        # Alias h/c state in-place (no second HBM allocation / extra writeback).
        input_output_aliases={1: 1, 2: 2},
        compiler_params=pltpu.CompilerParams(dimension_semantics=("arbitrary",)),
    )(x0_p, h_p, c_p, packed["w"], packed["bias"], packed["fc_w"], packed["fc_b"])

    prediction = pred_p[:B, :V]
    h_new = h_out_p[:, :B, :H]
    c_new = c_out_p[:, :B, :H]
    return prediction, (h_new, c_new)


# ------------------------------ pure-JAX reference ---------------------------

def decoder_forward_ref(params, input_ids, hidden):
    h, c = hidden
    x = params["emb"][input_ids]                            # (B, E)
    h_new, c_new = [], []
    for layer, p in enumerate(params["layers"]):
        H = h.shape[-1]
        gates = x @ p["wih_t"] + h[layer] @ p["whh_t"] + p["bias"]
        i = jax.nn.sigmoid(gates[:, 0 * H:1 * H])
        f = jax.nn.sigmoid(gates[:, 1 * H:2 * H])
        g = jnp.tanh(gates[:, 2 * H:3 * H])
        o = jax.nn.sigmoid(gates[:, 3 * H:4 * H])
        cn = f * c[layer] + i * g
        hn = o * jnp.tanh(cn)
        x = hn
        h_new.append(hn)
        c_new.append(cn)
    pred = x @ params["fc_w_t"] + params["fc_b"]
    return pred, (jnp.stack(h_new), jnp.stack(c_new))


# ------------------------------------ main -----------------------------------

if __name__ == "__main__":
    OUTPUT_DIM = 32   # len(target_vocab)
    EMB_DIM = 16
    HID_DIM = 32
    N_LAYERS = 2
    BATCH = 4

    key = jax.random.PRNGKey(0)
    kp, ki, kh, kc = jax.random.split(key, 4)

    params = init_decoder_params(kp, OUTPUT_DIM, EMB_DIM, HID_DIM, N_LAYERS)
    packed = pack_decoder_params(params)

    input_ids = jax.random.randint(ki, (BATCH,), 0, OUTPUT_DIM, dtype=jnp.int32)
    h0 = jax.random.normal(kh, (N_LAYERS, BATCH, HID_DIM), jnp.float32)
    c0 = jax.random.normal(kc, (N_LAYERS, BATCH, HID_DIM), jnp.float32)

    pred, (h1, c1) = decoder_forward(packed, input_ids, (h0, c0))
    jax.block_until_ready((pred, h1, c1))

    # sanity check against pure-JAX f32 reference (bf16 weight streaming in the
    # kernel -> loosened tolerance, per perf review)
    pred_r, (h1_r, c1_r) = decoder_forward_ref(params, input_ids, (h0, c0))
    assert pred.shape == (BATCH, OUTPUT_DIM)
    assert h1.shape == (N_LAYERS, BATCH, HID_DIM) and c1.shape == (N_LAYERS, BATCH, HID_DIM)
    assert jnp.allclose(pred, pred_r, atol=5e-2, rtol=5e-2)
    assert jnp.allclose(h1, h1_r, atol=5e-2, rtol=5e-2)
    assert jnp.allclose(c1, c1_r, atol=5e-2, rtol=5e-2)

    print("KERNEL_OK")
</pallas_src>

<mosaic_0001>
module attributes {stable_mosaic.version = 11 : i64} {
  func.func @_decoder_step_kernel(%arg0: i32, %arg1: memref<8x128xf32, #tpu.memory_space<vmem>>, %arg2: memref<1x8x128xf32, #tpu.memory_space<vmem>>, %arg3: memref<1x8x128xf32, #tpu.memory_space<vmem>>, %arg4: memref<1x256x512xbf16, #tpu.memory_space<vmem>>, %arg5: memref<1x1x512xf32, #tpu.memory_space<vmem>>, %arg6: memref<128x128xbf16, #tpu.memory_space<vmem>>, %arg7: memref<1x128xf32, #tpu.memory_space<vmem>>, %arg8: memref<8x128xf32, #tpu.memory_space<vmem>>, %arg9: memref<1x8x128xf32, #tpu.memory_space<vmem>>, %arg10: memref<1x8x128xf32, #tpu.memory_space<vmem>>, %arg11: memref<8x128xf32, #tpu.memory_space<vmem>>) attributes {dimension_semantics = [#tpu.dimension_semantics<arbitrary>], iteration_bounds = array<i64: 2>, scalar_prefetch = 0 : i64, scratch_operands = 1 : i64, tpu.core_type = #tpu.core_type<tc>, window_params = [{pipeline_mode = #tpu.pipeline_mode<synchronous>, transform_indices = @transform_0, window_bounds = array<i64: 8, 128>}, {transform_indices = @transform_1, window_bounds = array<i64: 1, 8, 128>}, {transform_indices = @transform_2, window_bounds = array<i64: 1, 8, 128>}, {transform_indices = @transform_3, window_bounds = array<i64: 1, 256, 512>}, {transform_indices = @transform_4, window_bounds = array<i64: 1, 1, 512>}, {pipeline_mode = #tpu.pipeline_mode<synchronous>, transform_indices = @transform_5, window_bounds = array<i64: 128, 128>}, {pipeline_mode = #tpu.pipeline_mode<synchronous>, transform_indices = @transform_6, window_bounds = array<i64: 1, 128>}, {pipeline_mode = #tpu.pipeline_mode<synchronous>, transform_indices = @transform_7, window_bounds = array<i64: 8, 128>}, {transform_indices = @transform_8, window_bounds = array<i64: 1, 8, 128>}, {transform_indices = @transform_9, window_bounds = array<i64: 1, 8, 128>}]} {
    %c0_i32 = arith.constant 0 : i32
    %0 = arith.cmpi eq, %arg0, %c0_i32 : i32
    %1 = arith.extui %0 : i1 to i32
    %c0_i32_0 = arith.constant 0 : i32
    %2 = arith.cmpi ne, %1, %c0_i32_0 : i32
    scf.if %2 {
      %c0_32 = arith.constant 0 : index
      %c0_33 = arith.constant 0 : index
      %60 = vector.load %arg1[%c0_32, %c0_33] : memref<8x128xf32, #tpu.memory_space<vmem>>, vector<8x128xf32>
      %c0_34 = arith.constant 0 : index
      %c0_35 = arith.constant 0 : index
      %61 = vector.load %arg11[%c0_34, %c0_35] : memref<8x128xf32, #tpu.memory_space<vmem>>, vector<8x128xf32>
      tpu.vector_store %arg11[%c0_34, %c0_35], %60 {strides = array<i32>} : memref<8x128xf32, #tpu.memory_space<vmem>>, vector<8x128xf32>,
    } else {
    }
    %c0 = arith.constant 0 : index
    %c0_1 = arith.constant 0 : index
    %3 = vector.load %arg11[%c0, %c0_1] : memref<8x128xf32, #tpu.memory_space<vmem>>, vector<8x128xf32>
    %c0_2 = arith.constant 0 : index
    %c0_3 = arith.constant 0 : index
    %c0_4 = arith.constant 0 : index
    %4 = vector.load %arg2[%c0_2, %c0_3, %c0_4] : memref<1x8x128xf32, #tpu.memory_space<vmem>>, vector<1x8x128xf32>
    %5 = vector.shape_cast %4 : vector<1x8x128xf32> to vector<8x128xf32>
    %c0_5 = arith.constant 0 : index
    %c0_6 = arith.constant 0 : index
    %c0_7 = arith.constant 0 : index
    %6 = vector.load %arg3[%c0_5, %c0_6, %c0_7] : memref<1x8x128xf32, #tpu.memory_space<vmem>>, vector<1x8x128xf32>
    %7 = vector.shape_cast %6 : vector<1x8x128xf32> to vector<8x128xf32>
    %8 = tpu.concatenate %3, %5 in 1 : vector<8x128xf32>, vector<8x128xf32> -> vector<8x256xf32>
    %9 = arith.truncf %8 : vector<8x256xf32> to vector<8x256xbf16>
    %c0_8 = arith.constant 0 : index
    %c0_9 = arith.constant 0 : index
    %c0_10 = arith.constant 0 : index
    %10 = vector.load %arg4[%c0_8, %c0_9, %c0_10] : memref<1x256x512xbf16, #tpu.memory_space<vmem>>, vector<1x256x512xbf16>
    %11 = vector.shape_cast %10 : vector<1x256x512xbf16> to vector<256x512xbf16>
    %cst = arith.constant dense<0.000000e+00> : vector<8x512xf32>
    %12 = tpu.matmul %9, %11, %cst {dimension_numbers = #tpu.dot_dimension_numbers<[1], [0], [0], [1], [0, 0, 1, 1], [], []>} : vector<8x256xbf16>, vector<256x512xbf16>, vector<8x512xf32> -> vector<8x512xf32>
    %c0_11 = arith.constant 0 : index
    %c0_12 = arith.constant 0 : index
    %c0_13 = arith.constant 0 : index
    %13 = vector.load %arg5[%c0_11, %c0_12, %c0_13] : memref<1x1x512xf32, #tpu.memory_space<vmem>>, vector<1x1x512xf32>
    %14 = vector.shape_cast %13 : vector<1x1x512xf32> to vector<1x512xf32>
    %15 = vector.broadcast %14 : vector<1x512xf32> to vector<8x512xf32>
    %16 = arith.addf %12, %15 : vector<8x512xf32>
    %17 = vector.extract_strided_slice %16 {offsets = [0, 0], sizes = [8, 128], strides = [1, 1]} : vector<8x512xf32> to vector<8x128xf32>
    %cst_14 = arith.constant 5.000000e-01 : f32
    %18 = vector.broadcast %cst_14 : f32 to vector<8x128xf32>
    %19 = arith.mulf %18, %17 : vector<8x128xf32>
    %20 = math.tanh %19 : vector<8x128xf32>
    %cst_15 = arith.constant 5.000000e-01 : f32
    %21 = vector.broadcast %cst_15 : f32 to vector<8x128xf32>
    %22 = arith.mulf %21, %20 : vector<8x128xf32>
    %cst_16 = arith.constant 5.000000e-01 : f32
    %23 = vector.broadcast %cst_16 : f32 to vector<8x128xf32>
    %24 = arith.addf %22, %23 : vector<8x128xf32>
    %25 = vector.extract_strided_slice %16 {offsets = [0, 128], sizes = [8, 128], strides = [1, 1]} : vector<8x512xf32> to vector<8x128xf32>
    %cst_17 = arith.constant 5.000000e-01 : f32
    %26 = vector.broadcast %cst_17 : f32 to vector<8x128xf32>
    %27 = arith.mulf %26, %25 : vector<8x128xf32>
    %28 = math.tanh %27 : vector<8x128xf32>
    %cst_18 = arith.constant 5.000000e-01 : f32
    %29 = vector.broadcast %cst_18 : f32 to vector<8x128xf32>
    %30 = arith.mulf %29, %28 : vector<8x128xf32>
    %cst_19 = arith.constant 5.000000e-01 : f32
    %31 = vector.broadcast %cst_19 : f32 to vector<8x128xf32>
    %32 = arith.addf %30, %31 : vector<8x128xf32>
    %33 = vector.extract_strided_slice %16 {offsets = [0, 256], sizes = [8, 128], strides = [1, 1]} : vector<8x512xf32> to vector<8x128xf32>
    %34 = math.tanh %33 : vector<8x128xf32>
    %35 = vector.extract_strided_slice %16 {offsets = [0, 384], sizes = [8, 128], strides = [1, 1]} : vector<8x512xf32> to vector<8x128xf32>
    %cst_20 = arith.constant 5.000000e-01 : f32
    %36 = vector.broadcast %cst_20 : f32 to vector<8x128xf32>
    %37 = arith.mulf %36, %35 : vector<8x128xf32>
    %38 = math.tanh %37 : vector<8x128xf32>
    %cst_21 = arith.constant 5.000000e-01 : f32
    %39 = vector.broadcast %cst_21 : f32 to vector<8x128xf32>
    %40 = arith.mulf %39, %38 : vector<8x128xf32>
    %cst_22 = arith.constant 5.000000e-01 : f32
    %41 = vector.broadcast %cst_22 : f32 to vector<8x128xf32>
    %42 = arith.addf %40, %41 : vector<8x128xf32>
    %43 = arith.mulf %32, %7 : vector<8x128xf32>
    %44 = arith.mulf %24, %34 : vector<8x128xf32>
    %45 = arith.addf %43, %44 : vector<8x128xf32>
    %46 = math.tanh %45 : vector<8x128xf32>
    %47 = arith.mulf %42, %46 : vector<8x128xf32>
    %c0_23 = arith.constant 0 : index
    %c0_24 = arith.constant 0 : index
    %c0_25 = arith.constant 0 : index
    %48 = vector.load %arg9[%c0_23, %c0_24, %c0_25] : memref<1x8x128xf32, #tpu.memory_space<vmem>>, vector<1x8x128xf32>
    %49 = vector.shape_cast %48 : vector<1x8x128xf32> to vector<8x128xf32>
    %50 = vector.shape_cast %47 : vector<8x128xf32> to vector<1x8x128xf32>
    tpu.vector_store %arg9[%c0_23, %c0_24, %c0_25], %50 {strides = array<i32>} : memref<1x8x128xf32, #tpu.memory_space<vmem>>, vector<1x8x128xf32>,
    %c0_26 = arith.constant 0 : index
    %c0_27 = arith.constant 0 : index
    %c0_28 = arith.constant 0 : index
    %51 = vector.load %arg10[%c0_26, %c0_27, %c0_28] : memref<1x8x128xf32, #tpu.memory_space<vmem>>, vector<1x8x128xf32>
    %52 = vector.shape_cast %51 : vector<1x8x128xf32> to vector<8x128xf32>
    %53 = vector.shape_cast %45 : vector<8x128xf32> to vector<1x8x128xf32>
    tpu.vector_store %arg10[%c0_26, %c0_27, %c0_28], %53 {strides = array<i32>} : memref<1x8x128xf32, #tpu.memory_space<vmem>>, vector<1x8x128xf32>,
    %c1_i32 = arith.constant 1 : i32
    %54 = arith.cmpi slt, %arg0, %c1_i32 : i32
    %55 = arith.extui %54 : i1 to i32
    %c0_i32_29 = arith.constant 0 : i32
    %56 = arith.cmpi ne, %55, %c0_i32_29 : i32
    scf.if %56 {
      %c0_32 = arith.constant 0 : index
      %c0_33 = arith.constant 0 : index
      %60 = vector.load %arg11[%c0_32, %c0_33] : memref<8x128xf32, #tpu.memory_space<vmem>>, vector<8x128xf32>
      tpu.vector_store %arg11[%c0_32, %c0_33], %47 {strides = array<i32>} : memref<8x128xf32, #tpu.memory_space<vmem>>, vector<8x128xf32>,
    } else {
    }
    %c1_i32_30 = arith.constant 1 : i32
    %57 = arith.cmpi eq, %arg0, %c1_i32_30 : i32
    %58 = arith.extui %57 : i1 to i32
    %c0_i32_31 = arith.constant 0 : i32
    %59 = arith.cmpi ne, %58, %c0_i32_31 : i32
    scf.if %59 {
      %60 = arith.truncf %47 : vector<8x128xf32> to vector<8x128xbf16>
      %c0_32 = arith.constant 0 : index
      %c0_33 = arith.constant 0 : index
      %61 = vector.load %arg6[%c0_32, %c0_33] : memref<128x128xbf16, #tpu.memory_space<vmem>>, vector<128x128xbf16>
      %cst_34 = arith.constant dense<0.000000e+00> : vector<8x128xf32>
      %62 = tpu.matmul %60, %61, %cst_34 {dimension_numbers = #tpu.dot_dimension_numbers<[1], [0], [0], [1], [0, 0, 1, 1], [], []>} : vector<8x128xbf16>, vector<128x128xbf16>, vector<8x128xf32> -> vector<8x128xf32>
      %c0_35 = arith.constant 0 : index
      %c0_36 = arith.constant 0 : index
      %63 = vector.load %arg7[%c0_35, %c0_36] : memref<1x128xf32, #tpu.memory_space<vmem>>, vector<1x128xf32>
      %64 = vector.broadcast %63 : vector<1x128xf32> to vector<8x128xf32>
      %65 = arith.addf %62, %64 : vector<8x128xf32>
      %c0_37 = arith.constant 0 : index
      %c0_38 = arith.constant 0 : index
      %66 = vector.load %arg8[%c0_37, %c0_38] : memref<8x128xf32, #tpu.memory_space<vmem>>, vector<8x128xf32>
      tpu.vector_store %arg8[%c0_37, %c0_38], %65 {strides = array<i32>} : memref<8x128xf32, #tpu.memory_space<vmem>>, vector<8x128xf32>,
    } else {
    }
    return
  }
  func.func @transform_0(%arg0: i32) -> (i32, i32) {
    %c0_i32 = arith.constant 0 : i32
    %c0_i32_0 = arith.constant 0 : i32
    %c0_i32_1 = arith.constant 0 : i32
    return %c0_i32, %c0_i32_0 : i32, i32
  }
  func.func @transform_1(%arg0: i32) -> (i32, i32, i32) {
    %c0_i32 = arith.constant 0 : i32
    %c0_i32_0 = arith.constant 0 : i32
    %c0_i32_1 = arith.constant 0 : i32
    return %arg0, %c0_i32, %c0_i32_0 : i32, i32, i32
  }
  func.func @transform_2(%arg0: i32) -> (i32, i32, i32) {
    %c0_i32 = arith.constant 0 : i32
    %c0_i32_0 = arith.constant 0 : i32
    %c0_i32_1 = arith.constant 0 : i32
    return %arg0, %c0_i32, %c0_i32_0 : i32, i32, i32
  }
  func.func @transform_3(%arg0: i32) -> (i32, i32, i32) {
    %c0_i32 = arith.constant 0 : i32
    %c0_i32_0 = arith.constant 0 : i32
    %c0_i32_1 = arith.constant 0 : i32
    return %arg0, %c0_i32, %c0_i32_0 : i32, i32, i32
  }
  func.func @transform_4(%arg0: i32) -> (i32, i32, i32) {
    %c0_i32 = arith.constant 0 : i32
    %c0_i32_0 = arith.constant 0 : i32
    %c0_i32_1 = arith.constant 0 : i32
    return %arg0, %c0_i32, %c0_i32_0 : i32, i32, i32
  }
  func.func @transform_5(%arg0: i32) -> (i32, i32) {
    %c0_i32 = arith.constant 0 : i32
    %c0_i32_0 = arith.constant 0 : i32
    %c0_i32_1 = arith.constant 0 : i32
    return %c0_i32, %c0_i32_0 : i32, i32
  }
  func.func @transform_6(%arg0: i32) -> (i32, i32) {
    %c0_i32 = arith.constant 0 : i32
    %c0_i32_0 = arith.constant 0 : i32
    %c0_i32_1 = arith.constant 0 : i32
    return %c0_i32, %c0_i32_0 : i32, i32
  }
  func.func @transform_7(%arg0: i32) -> (i32, i32) {
    %c0_i32 = arith.constant 0 : i32
    %c0_i32_0 = arith.constant 0 : i32
    %c0_i32_1 = arith.constant 0 : i32
    return %c0_i32, %c0_i32_0 : i32, i32
  }
  func.func @transform_8(%arg0: i32) -> (i32, i32, i32) {
    %c0_i32 = arith.constant 0 : i32
    %c0_i32_0 = arith.constant 0 : i32
    %c0_i32_1 = arith.constant 0 : i32
    return %arg0, %c0_i32, %c0_i32_0 : i32, i32, i32
  }
  func.func @transform_9(%arg0: i32) -> (i32, i32, i32) {
    %c0_i32 = arith.constant 0 : i32
    %c0_i32_0 = arith.constant 0 : i32
    %c0_i32_1 = arith.constant 0 : i32
    return %arg0, %c0_i32, %c0_i32_0 : i32, i32, i32
  }
}

</mosaic_0001>

<llo_original>
// kernel: decoder_forward.1
$region0: #{decoder_forward.1}
  #allocation0 [shape = 'u32[]', space=smem, size = 0x4, offset = 0x4, fixed_abs, tag = 'smem constant byte address 0x4 - core index']
  #allocation1 [shape = 'u32[144,128]{1,0:T(1,128)}', space=vmem, size = 0x12000, scoped, tag = 'internal scratch']
  #allocation2 [shape = 'f32[8,128]{1,0:T(8,128)}', space=vmem, size = 0x1000, scoped, tag = 'scratch operand']
  %s0 = inlined_call_operand.vmem [shape: f32[8,128], index: 0, kind: input, shape index: {}]
  %s1 = inlined_call_operand.vmem [shape: f32[2,8,128], index: 1, kind: input, shape index: {}, may-alias: {1,8}]
  %s2 = inlined_call_operand.vmem [shape: f32[2,8,128], index: 2, kind: input, shape index: {}, may-alias: {2,9}]
  %s3 = inlined_call_operand.hbm [shape: bf16[2,256,512], index: 3, kind: input, shape index: {}]
  %s4 = inlined_call_operand.vmem [shape: f32[2,1,512], index: 4, kind: input, shape index: {}]
  %s5 = inlined_call_operand.vmem [shape: bf16[128,128], index: 5, kind: input, shape index: {}]
  %s6 = inlined_call_operand.vmem [shape: f32[1,128], index: 6, kind: input, shape index: {}]
  %s7 = inlined_call_operand.vmem [shape: f32[8,128], index: 7, kind: output, shape index: {0}]
  %s8 = inlined_call_operand.vmem [shape: f32[2,8,128], index: 8, kind: output, shape index: {1}, may-alias: {1,8}]
  %s9 = inlined_call_operand.vmem [shape: f32[2,8,128], index: 9, kind: output, shape index: {2}, may-alias: {2,9}]
  %10 = xla_tuple %s7, %s8, %s9
  %s11 = sld [smem:[#allocation0]]
  $region93: #{decoder_forward.1} parent=0
    _
  %s13 = ssub.s32 1, %s11
  %s14 = scalar_select 0, %s13, %s11
  $region1: #{decoder_forward.1} parent=0
    #allocation3 [shape = 'u8[524288]{0}', space=vmem, size = 0x80000, scoped, tag = 'input window, operand 3']
    #allocation4 [shape = 's32[2]{0}', space=sflag, size = 0x8, scoped, tag = 'scoped memory for decoder_forward.1']
    %15 = vsyncpa [#allocation4], 0
    %s16 = scalar_lea.sflag [#allocation4], 1
    %17 = vsyncpa %s16, 0
    loop: start=0, step=1, limit=4
    $region2: #{decoder_forward.1} parent=1 // loop_pre_header
      _
    $region3: #{decoder_forward.1} parent=1 // loop_header
      %s19 = sphi 0, %s23
      %p20 = scmp.ge.s32.totalorder %s19, 4
      %s27 = sphi 0, %s27
      %s29 = sphi 0, %s27
      %s30 = sphi 0, %s29
      %s44 = sphi 0, %s30
      %s50 = sphi 0, %s52
      %s53 = sphi 0, %s50
      %s54 = sphi 0, %s53
      %s70 = sphi 0, %s54
      %s76 = sphi 0, %s78
      %s79 = sphi 0, %s76
      %s80 = sphi 0, %s79
      %s96 = sphi 0, %s80
      %s102 = sphi 0, %s104
      %s105 = sphi 0, %s102
      %s106 = sphi 0, %s105
      %s122 = sphi 0, %s106
      %s128 = sphi 0, %s130
      %s131 = sphi 0, %s128
      %s132 = sphi 0, %s131
      %s148 = sphi 0, %s132
      %s152 = sphi 0, %s152
      %s154 = sphi 0, %s152
      %s155 = sphi 0, %s154
      %s169 = sphi 0, %s155
      %s173 = sphi 0, %s173
      %s175 = sphi 0, %s173
      %s176 = sphi 0, %s175
      %s190 = sphi 0, %s176
      %s194 = sphi 0, %s194
      %s196 = sphi 0, %s194
      %s197 = sphi 0, %s196
      %s211 = sphi 0, %s197
      %s217 = sphi 0, %s219
      %s220 = sphi 0, %s217
      %s221 = sphi 0, %s220
      %s237 = sphi 0, %s221
      %s243 = sphi 0, %s245
      %s246 = sphi 0, %s243
      %s247 = sphi 0, %s246
      %s263 = sphi 0, %s247
    $region4: #{decoder_forward.1} parent=1 // loop_header_branch
      %22 = sbr.rel (%p20) target = $region8
    $region5: #{decoder_forward.1} parent=1 // loop_body
      %s24 = ssub.s32 %s19, 1
      %s25 = ssub.s32 %s19, 2
      %s26 = sadd.s32 %s19, 1
      %s28 = sadd.s32 %s27, 1
      %p31 = scmp.eq.s32.totalorder %s19, 1
      %p32 = scmp.ne.s32.totalorder %s27, %s29
      %p33 = scmp.eq.s32.totalorder %s19, 0
      %p34 = por %p32, %p33
      %p35 = scmp.ne.s32.totalorder %s27, %s29
      %p36 = scmp.eq.s32.totalorder %s24, 1
      %p37 = por %p35, %p36
      %p38 = scmp.ne.s32.totalorder %s29, %s30
      %p39 = scmp.eq.s32.totalorder %s24, 0
      %p40 = por %p38, %p39
      %p41 = scmp.ne.s32.totalorder %s29, %s30
      %p42 = scmp.eq.s32.totalorder %s25, 1
      %p43 = por %p41, %p42
      %p45 = scmp.ne.s32.totalorder %s30, %s44
      %p46 = scmp.eq.s32.totalorder %s25, 0
      %p47 = por %p45, %p46
      %s48 = ssub.s32 %s19, %s26
      %p49 = scmp.eq.s32.totalorder %s48, 0
      %s51 = sadd.s32 %s50, 1
      %s52 = scalar_select %p49, %s50, %s51
      %p55 = pneg %p49
      %p56 = scmp.eq.s32.totalorder %s19, 1
      %p57 = por %p55, %p56
      %p58 = scmp.ne.s32.totalorder %s50, %s53
      %p59 = scmp.eq.s32.totalorder %s19, 0
      %p60 = por %p58, %p59
      %p61 = scmp.ne.s32.totalorder %s50, %s53
      %p62 = scmp.eq.s32.totalorder %s24, 1
      %p63 = por %p61, %p62
      %p64 = scmp.ne.s32.totalorder %s53, %s54
      %p65 = scmp.eq.s32.totalorder %s24, 0
      %p66 = por %p64, %p65
      %p67 = scmp.ne.s32.totalorder %s53, %s54
      %p68 = scmp.eq.s32.totalorder %s25, 1
      %p69 = por %p67, %p68
      %p71 = scmp.ne.s32.totalorder %s54, %s70
      %p72 = scmp.eq.s32.totalorder %s25, 0
      %p73 = por %p71, %p72
      %s74 = ssub.s32 %s19, %s26
      %p75 = scmp.eq.s32.totalorder %s74, 0
      %s77 = sadd.s32 %s76, 1
      %s78 = scalar_select %p75, %s76, %s77
      %p81 = pneg %p75
      %p82 = scmp.eq.s32.totalorder %s19, 1
      %p83 = por %p81, %p82
      %p84 = scmp.ne.s32.totalorder %s76, %s79
      %p85 = scmp.eq.s32.totalorder %s19, 0
      %p86 = por %p84, %p85
      %p87 = scmp.ne.s32.totalorder %s76, %s79
      %p88 = scmp.eq.s32.totalorder %s24, 1
      %p89 = por %p87, %p88
      %p90 = scmp.ne.s32.totalorder %s79, %s80
      %p91 = scmp.eq.s32.totalorder %s24, 0
      %p92 = por %p90, %p91
      %p93 = scmp.ne.s32.totalorder %s79, %s80
      %p94 = scmp.eq.s32.totalorder %s25, 1
      %p95 = por %p93, %p94
      %p97 = scmp.ne.s32.totalorder %s80, %s96
      %p98 = scmp.eq.s32.totalorder %s25, 0
      %p99 = por %p97, %p98
      %s100 = ssub.s32 %s19, %s26
      %p101 = scmp.eq.s32.totalorder %s100, 0
      %s103 = sadd.s32 %s102, 1
      %s104 = scalar_select %p101, %s102, %s103
      %p107 = pneg %p101
      %p108 = scmp.eq.s32.totalorder %s19, 1
      %p109 = por %p107, %p108
      %p110 = scmp.ne.s32.totalorder %s102, %s105
      %p111 = scmp.eq.s32.totalorder %s19, 0
      %p112 = por %p110, %p111
      %p113 = scmp.ne.s32.totalorder %s102, %s105
      %p114 = scmp.eq.s32.totalorder %s24, 1
      %p115 = por %p113, %p114
      %p116 = scmp.ne.s32.totalorder %s105, %s106
      %p117 = scmp.eq.s32.totalorder %s24, 0
      %p118 = por %p116, %p117
      %p119 = scmp.ne.s32.totalorder %s105, %s106
      %p120 = scmp.eq.s32.totalorder %s25, 1
      %p121 = por %p119, %p120
      %p123 = scmp.ne.s32.totalorder %s106, %s122
      %p124 = scmp.eq.s32.totalorder %s25, 0
      %p125 = por %p123, %p124
      %s126 = ssub.s32 %s19, %s26
      %p127 = scmp.eq.s32.totalorder %s126, 0
      %s129 = sadd.s32 %s128, 1
      %s130 = scalar_select %p127, %s128, %s129
      %p133 = pneg %p127
      %p134 = scmp.eq.s32.totalorder %s19, 1
      %p135 = por %p133, %p134
      %p136 = scmp.ne.s32.totalorder %s128, %s131
      %p137 = scmp.eq.s32.totalorder %s19, 0
      %p138 = por %p136, %p137
      %p139 = scmp.ne.s32.totalorder %s128, %s131
      %p140 = scmp.eq.s32.totalorder %s24, 1
      %p141 = por %p139, %p140
      %p142 = scmp.ne.s32.totalorder %s131, %s132
      %p143 = scmp.eq.s32.totalorder %s24, 0
      %p144 = por %p142, %p143
      %p145 = scmp.ne.s32.totalorder %s131, %s132
      %p146 = scmp.eq.s32.totalorder %s25, 1
      %p147 = por %p145, %p146
      %p149 = scmp.ne.s32.totalorder %s132, %s148
      %p150 = scmp.eq.s32.totalorder %s25, 0
      %p151 = por %p149, %p150
      %s153 = sadd.s32 %s152, 1
      %p156 = scmp.eq.s32.totalorder %s19, 1
      %p157 = scmp.ne.s32.totalorder %s152, %s154
      %p158 = scmp.eq.s32.totalorder %s19, 0
      %p159 = por %p157, %p158
      %p160 = scmp.ne.s32.totalorder %s152, %s154
      %p161 = scmp.eq.s32.totalorder %s24, 1
      %p162 = por %p160, %p161
      %p163 = scmp.ne.s32.totalorder %s154, %s155
      %p164 = scmp.eq.s32.totalorder %s24, 0
      %p165 = por %p163, %p164
      %p166 = scmp.ne.s32.totalorder %s154, %s155
      %p167 = scmp.eq.s32.totalorder %s25, 1
      %p168 = por %p166, %p167
      %p170 = scmp.ne.s32.totalorder %s155, %s169
      %p171 = scmp.eq.s32.totalorder %s25, 0
      %p172 = por %p170, %p171
      %s174 = sadd.s32 %s173, 1
      %p177 = scmp.eq.s32.totalorder %s19, 1
      %p178 = scmp.ne.s32.totalorder %s173, %s175
      %p179 = scmp.eq.s32.totalorder %s19, 0
      %p180 = por %p178, %p179
      %p181 = scmp.ne.s32.totalorder %s173, %s175
      %p182 = scmp.eq.s32.totalorder %s24, 1
      %p183 = por %p181, %p182
      %p184 = scmp.ne.s32.totalorder %s175, %s176
      %p185 = scmp.eq.s32.totalorder %s24, 0
      %p186 = por %p184, %p185
      %p187 = scmp.ne.s32.totalorder %s175, %s176
      %p188 = scmp.eq.s32.totalorder %s25, 1
      %p189 = por %p187, %p188
      %p191 = scmp.ne.s32.totalorder %s176, %s190
      %p192 = scmp.eq.s32.totalorder %s25, 0
      %p193 = por %p191, %p192
      %s195 = sadd.s32 %s194, 1
      %p198 = scmp.eq.s32.totalorder %s19, 1
      %p199 = scmp.ne.s32.totalorder %s194, %s196
      %p200 = scmp.eq.s32.totalorder %s19, 0
      %p201 = por %p199, %p200
      %p202 = scmp.ne.s32.totalorder %s194, %s196
      %p203 = scmp.eq.s32.totalorder %s24, 1
      %p204 = por %p202, %p203
      %p205 = scmp.ne.s32.totalorder %s196, %s197
      %p206 = scmp.eq.s32.totalorder %s24, 0
      %p207 = por %p205, %p206
      %p208 = scmp.ne.s32.totalorder %s196, %s197
      %p209 = scmp.eq.s32.totalorder %s25, 1
      %p210 = por %p208, %p209
      %p212 = scmp.ne.s32.totalorder %s197, %s211
      %p213 = scmp.eq.s32.totalorder %s25, 0
      %p214 = por %p212, %p213
      %s215 = ssub.s32 %s19, %s26
      %p216 = scmp.eq.s32.totalorder %s215, 0
      %s218 = sadd.s32 %s217, 1
      %s219 = scalar_select %p216, %s217, %s218
      %p222 = pneg %p216
      %p223 = scmp.eq.s32.totalorder %s19, 1
      %p224 = por %p222, %p223
      %p225 = scmp.ne.s32.totalorder %s217, %s220
      %p226 = scmp.eq.s32.totalorder %s19, 0
      %p227 = por %p225, %p226
      %p228 = scmp.ne.s32.totalorder %s217, %s220
      %p229 = scmp.eq.s32.totalorder %s24, 1
      %p230 = por %p228, %p229
      %p231 = scmp.ne.s32.totalorder %s220, %s221
      %p232 = scmp.eq.s32.totalorder %s24, 0
      %p233 = por %p231, %p232
      %p234 = scmp.ne.s32.totalorder %s220, %s221
      %p235 = scmp.eq.s32.totalorder %s25, 1
      %p236 = por %p234, %p235
      %p238 = scmp.ne.s32.totalorder %s221, %s237
      %p239 = scmp.eq.s32.totalorder %s25, 0
      %p240 = por %p238, %p239
      %s241 = ssub.s32 %s19, %s26
      %p242 = scmp.eq.s32.totalorder %s241, 0
      %s244 = sadd.s32 %s243, 1
      %s245 = scalar_select %p242, %s243, %s244
      %p248 = pneg %p242
      %p249 = scmp.eq.s32.totalorder %s19, 1
      %p250 = por %p248, %p249
      %p251 = scmp.ne.s32.totalorder %s243, %s246
      %p252 = scmp.eq.s32.totalorder %s19, 0
      %p253 = por %p251, %p252
      %p254 = scmp.ne.s32.totalorder %s243, %s246
      %p255 = scmp.eq.s32.totalorder %s24, 1
      %p256 = por %p254, %p255
      %p257 = scmp.ne.s32.totalorder %s246, %s247
      %p258 = scmp.eq.s32.totalorder %s24, 0
      %p259 = por %p257, %p258
      %p260 = scmp.ne.s32.totalorder %s246, %s247
      %p261 = scmp.eq.s32.totalorder %s25, 1
      %p262 = por %p260, %p261
      %p264 = scmp.ne.s32.totalorder %s247, %s263
      %p265 = scmp.eq.s32.totalorder %s25, 0
      %p266 = por %p264, %p265
      %p267 = scmp.le.s32.totalorder 1, %s19
      %p268 = scmp.lt.s32.totalorder %s19, 3
      %p269 = pnand %p267, %p268
      %p270 = pneg %p269
      // Predicated region
      $region9: #{decoder_forward.1} parent=5 // pred_check
        _
      $region10: #{decoder_forward.1} parent=5 // pred_check_branch
        %272 = sbr.rel (%p269) target = $region12
      $region11: #{decoder_forward.1} parent=5 // pred_region
        %s273 = ssub.s32 %s19, 1
        // Predicated region
        $region13: #{decoder_forward.1} parent=11 // pred_check
          %p274 = pneg %p40
        $region14: #{decoder_forward.1} parent=11 // pred_check_branch
          %276 = sbr.rel (%p274) target = $region16
        $region15: #{decoder_forward.1} parent=11 // pred_region
          _
        $region16: #{decoder_forward.1} parent=11 // pred_fallthru
          _
        // Predicated region
        $region17: #{decoder_forward.1} parent=11 // pred_check
          %p277 = pneg %p165
        $region18: #{decoder_forward.1} parent=11 // pred_check_branch
          %279 = sbr.rel (%p277) target = $region20
        $region19: #{decoder_forward.1} parent=11 // pred_region
          _
        $region20: #{decoder_forward.1} parent=11 // pred_fallthru
          _
        // Predicated region
        $region21: #{decoder_forward.1} parent=11 // pred_check
          %p280 = pneg %p186
        $region22: #{decoder_forward.1} parent=11 // pred_check_branch
          %282 = sbr.rel (%p280) target = $region24
        $region23: #{decoder_forward.1} parent=11 // pred_region
          _
        $region24: #{decoder_forward.1} parent=11 // pred_fallthru
          _
      $region12: #{decoder_forward.1} parent=5 // pred_fallthru
        _
      %p283 = scmp.lt.s32.totalorder %s19, 2
      // Predicated region
      $region25: #{decoder_forward.1} parent=5 // pred_check
        %p284 = pneg %p283
      $region26: #{decoder_forward.1} parent=5 // pred_check_branch
        %286 = sbr.rel (%p284) target = $region28
      $region27: #{decoder_forward.1} parent=5 // pred_region
        // Predicated region
        $region29: #{decoder_forward.1} parent=27 // pred_check
          %p287 = pneg %p60
        $region30: #{decoder_forward.1} parent=27 // pred_check_branch
          %289 = sbr.rel (%p287) target = $region32
        $region31: #{decoder_forward.1} parent=27 // pred_region
          %p290 = scmp.lt.s32.totalorder %s19, 1
          %s291 = scalar_select %p290, %s19, 1
          %s292 = smul.addr %s291, 8
          %s293 = scalar_lea.vmem %s1, %s292
        $region32: #{decoder_forward.1} parent=27 // pred_fallthru
          _
        // Predicated region
        $region33: #{decoder_forward.1} parent=27 // pred_check
          %p294 = pneg %p86
        $region34: #{decoder_forward.1} parent=27 // pred_check_branch
          %296 = sbr.rel (%p294) target = $region36
        $region35: #{decoder_forward.1} parent=27 // pred_region
          %p297 = scmp.lt.s32.totalorder %s19, 1
          %s298 = scalar_select %p297, %s19, 1
          %s299 = smul.addr %s298, 8
          %s300 = scalar_lea.vmem %s2, %s299
        $region36: #{decoder_forward.1} parent=27 // pred_fallthru
          _
        // Predicated region
        $region37: #{decoder_forward.1} parent=27 // pred_check
          %p301 = pneg %p112
        $region38: #{decoder_forward.1} parent=27 // pred_check_branch
          %303 = sbr.rel (%p301) target = $region40
        $region39: #{decoder_forward.1} parent=27 // pred_region
          %s304 = sand.u32 %s102, 1
          %s305 = scalar_lea.sflag [#allocation4], %s304
          %s306 = sand.u32 %s102, 1
          %s307 = smul.addr %s306, 512
          %s308 = scalar_lea.vmem [#allocation3], %s307
          %s310 = ssub.s32 8192, 8192
          %311 = vsyncadd %s305, %s310
          %s312 = smul.addr %s19, 128
          %s313 = smul.addr %s312, 64
          %s314 = scalar_lea.hbm %s3, %s313
          %s315 = sshll.u32 %s308, 4
          %s316 = int_to_ptr.vmem [resolvable:$true] %s315
          %321 = dma.hbm_to_vmem [thread:$0]  %s314, 8192, %s316, %s305, 256, 256, 16
        $region40: #{decoder_forward.1} parent=27 // pred_fallthru
          _
        // Predicated region
        $region41: #{decoder_forward.1} parent=27 // pred_check
          %p322 = pneg %p138
        $region42: #{decoder_forward.1} parent=27 // pred_check_branch
          %324 = sbr.rel (%p322) target = $region44
        $region43: #{decoder_forward.1} parent=27 // pred_region
          %p325 = scmp.lt.s32.totalorder %s19, 1
          %s326 = scalar_select %p325, %s19, 1
          %s327 = smul.addr %s326, 4
          %s328 = scalar_lea.vmem %s4, %s327
        $region44: #{decoder_forward.1} parent=27 // pred_fallthru
          _
      $region28: #{decoder_forward.1} parent=5 // pred_fallthru
        _
      %p329 = scmp.le.s32.totalorder 1, %s19
      %p330 = scmp.lt.s32.totalorder %s19, 3
      %p331 = pnand %p329, %p330
      %p332 = pneg %p331
      // Predicated region
      $region45: #{decoder_forward.1} parent=5 // pred_check
        _
      $region46: #{decoder_forward.1} parent=5 // pred_check_branch
        %334 = sbr.rel (%p331) target = $region48
      $region47: #{decoder_forward.1} parent=5 // pred_region
        %s335 = ssub.s32 %s19, 1
        %s336 = sand.u32 %s105, 1
        %s337 = scalar_lea.sflag [#allocation4], %s336
        %s338 = sand.u32 %s105, 1
        %s339 = smul.addr %s338, 512
        %s340 = scalar_lea.vmem [#allocation3], %s339
        // Predicated region
        $region49: #{decoder_forward.1} parent=47 // pred_check
          %p341 = pneg %p118
        $region50: #{decoder_forward.1} parent=47 // pred_check_branch
          %343 = sbr.rel (%p341) target = $region52
        $region51: #{decoder_forward.1} parent=47 // pred_region
          %344 = dma.done %s337, 8192
        $region52: #{decoder_forward.1} parent=47 // pred_fallthru
          _
        %p345 = pneg %p40
        %p346 = pneg %p37
        %p347 = scmp.lt.s32.totalorder %s24, 1
        %s348 = scalar_select %p347, %s24, 1
        %s349 = smul.addr %s348, 8
        %s350 = scalar_lea.vmem %s1, %s349
        %p351 = pneg %p66
        %p352 = pneg %p63
        %p353 = scmp.lt.s32.totalorder %s24, 1
        %s354 = scalar_select %p353, %s24, 1
        %s355 = smul.addr %s354, 8
        %s356 = scalar_lea.vmem %s2, %s355
        %p357 = pneg %p92
        %p358 = pneg %p89
        %s359 = sand.u32 %s105, 1
        %s360 = scalar_lea.sflag [#allocation4], %s359
        %s361 = sand.u32 %s105, 1
        %s362 = smul.addr %s361, 512
        %s363 = scalar_lea.vmem [#allocation3], %s362
        %p364 = pneg %p118
        %p365 = pneg %p115
        %p366 = scmp.lt.s32.totalorder %s24, 1
        %s367 = scalar_select %p366, %s24, 1
        %s368 = smul.addr %s367, 4
        %s369 = scalar_lea.vmem %s4, %s368
        %p370 = pneg %p144
        %p371 = pneg %p141
        %p372 = pneg %p165
        %p373 = pneg %p162
        %p374 = pneg %p186
        %p375 = pneg %p183
        %p376 = pneg %p207
        %p377 = pneg %p204
        %p378 = pneg %p233
        %p379 = pneg %p230
        %p380 = scmp.lt.s32.totalorder %s24, 1
        %s381 = scalar_select %p380, %s24, 1
        %s382 = smul.addr %s381, 8
        %s383 = scalar_lea.vmem %s8, %s382
        %p384 = pneg %p259
        %p385 = pneg %p256
        %p386 = scmp.lt.s32.totalorder %s24, 1
        %s387 = scalar_select %p386, %s24, 1
        %s388 = smul.addr %s387, 8
        %s389 = scalar_lea.vmem %s9, %s388
        %p390 = scmp.lt.s32.totalorder %s24, 1
        %s391 = scalar_select %p390, %s24, 1
        %s392 = smul.addr %s391, 8
        %s393 = scalar_lea.vmem %s1, %s392
        %p394 = scmp.lt.s32.totalorder %s24, 1
        %s395 = scalar_select %p394, %s24, 1
        %s396 = smul.addr %s395, 8
        %s397 = scalar_lea.vmem %s2, %s396
        %p398 = scmp.lt.s32.totalorder %s24, 1
        %s399 = scalar_select %p398, %s24, 1
        %s400 = smul.addr %s399, 4
        %s401 = scalar_lea.vmem %s4, %s400
        %p402 = scmp.lt.s32.totalorder %s24, 1
        %s403 = scalar_select %p402, %s24, 1
        %s404 = smul.addr %s403, 8
        %s405 = scalar_lea.vmem %s8, %s404
        %p406 = scmp.lt.s32.totalorder %s24, 1
        %s407 = scalar_select %p406, %s24, 1
        %s408 = smul.addr %s407, 8
        %s409 = scalar_lea.vmem %s9, %s408
        %p411 = scmp.eq.s32.totalorder %s24, 0
        // Predicated region
        $region53: #{decoder_forward.1} parent=47 // pred_check
          %p412 = pneg %p411
        $region54: #{decoder_forward.1} parent=47 // pred_check_branch
          %414 = sbr.rel (%p412) target = $region56
        $region55: #{decoder_forward.1} parent=47 // pred_region
          %v415 = vld [vmem:[%s0] sm:$0xff]
          %416 = vst [vmem:[#allocation2] sm:$0xff] %v415
        $region56: #{decoder_forward.1} parent=47 // pred_fallthru
          _
        %v417 = vld [vmem:[#allocation2] sm:$0xff]
        %v418 = vld [vmem:[%s393] sm:$0xff]
        %v419 = vld [vmem:[%s397] sm:$0xff]
        %v420 = vpack.c.bf16 %v417, %v417
        %v421 = vpack.c.bf16 %v418, %v418
        %v422 = vld [vmem:[%s340] sm:$0xff]
        %v423 = vld [vmem:[%s340 + $0x8] sm:$0xff]
        %v424 = vld [vmem:[%s340 + $0x10] sm:$0xff]
        %v425 = vld [vmem:[%s340 + $0x18] sm:$0xff]
        %v426 = vld [vmem:[%s340 + $0x20] sm:$0xff]
        %v427 = vld [vmem:[%s340 + $0x28] sm:$0xff]
        %v428 = vld [vmem:[%s340 + $0x30] sm:$0xff]
        %v429 = vld [vmem:[%s340 + $0x38] sm:$0xff]
        %v430 = vld [vmem:[%s340 + $0x40] sm:$0xff]
        %v431 = vld [vmem:[%s340 + $0x48] sm:$0xff]
        %v432 = vld [vmem:[%s340 + $0x50] sm:$0xff]
        %v433 = vld [vmem:[%s340 + $0x58] sm:$0xff]
        %v434 = vld [vmem:[%s340 + $0x60] sm:$0xff]
        %v435 = vld [vmem:[%s340 + $0x68] sm:$0xff]
        %v436 = vld [vmem:[%s340 + $0x70] sm:$0xff]
        %v437 = vld [vmem:[%s340 + $0x78] sm:$0xff]
        %v438 = vld [vmem:[%s340 + $0x80] sm:$0xff]
        %v439 = vld [vmem:[%s340 + $0x88] sm:$0xff]
        %v440 = vld [vmem:[%s340 + $0x90] sm:$0xff]
        %v441 = vld [vmem:[%s340 + $0x98] sm:$0xff]
        %v442 = vld [vmem:[%s340 + $0xa0] sm:$0xff]
        %v443 = vld [vmem:[%s340 + $0xa8] sm:$0xff]
        %v444 = vld [vmem:[%s340 + $0xb0] sm:$0xff]
        %v445 = vld [vmem:[%s340 + $0xb8] sm:$0xff]
        %v446 = vld [vmem:[%s340 + $0xc0] sm:$0xff]
        %v447 = vld [vmem:[%s340 + $0xc8] sm:$0xff]
        %v448 = vld [vmem:[%s340 + $0xd0] sm:$0xff]
        %v449 = vld [vmem:[%s340 + $0xd8] sm:$0xff]
        %v450 = vld [vmem:[%s340 + $0xe0] sm:$0xff]
        %v451 = vld [vmem:[%s340 + $0xe8] sm:$0xff]
        %v452 = vld [vmem:[%s340 + $0xf0] sm:$0xff]
        %v453 = vld [vmem:[%s340 + $0xf8] sm:$0xff]
        %v454 = vld [vmem:[%s340 + $0x100] sm:$0xff]
        %v455 = vld [vmem:[%s340 + $0x108] sm:$0xff]
        %v456 = vld [vmem:[%s340 + $0x110] sm:$0xff]
        %v457 = vld [vmem:[%s340 + $0x118] sm:$0xff]
        %v458 = vld [vmem:[%s340 + $0x120] sm:$0xff]
        %v459 = vld [vmem:[%s340 + $0x128] sm:$0xff]
        %v460 = vld [vmem:[%s340 + $0x130] sm:$0xff]
        %v461 = vld [vmem:[%s340 + $0x138] sm:$0xff]
        %v462 = vld [vmem:[%s340 + $0x140] sm:$0xff]
        %v463 = vld [vmem:[%s340 + $0x148] sm:$0xff]
        %v464 = vld [vmem:[%s340 + $0x150] sm:$0xff]
        %v465 = vld [vmem:[%s340 + $0x158] sm:$0xff]
        %v466 = vld [vmem:[%s340 + $0x160] sm:$0xff]
        %v467 = vld [vmem:[%s340 + $0x168] sm:$0xff]
        %v468 = vld [vmem:[%s340 + $0x170] sm:$0xff]
        %v469 = vld [vmem:[%s340 + $0x178] sm:$0xff]
        %v470 = vld [vmem:[%s340 + $0x180] sm:$0xff]
        %v471 = vld [vmem:[%s340 + $0x188] sm:$0xff]
        %v472 = vld [vmem:[%s340 + $0x190] sm:$0xff]
        %v473 = vld [vmem:[%s340 + $0x198] sm:$0xff]
        %v474 = vld [vmem:[%s340 + $0x1a0] sm:$0xff]
        %v475 = vld [vmem:[%s340 + $0x1a8] sm:$0xff]
        %v476 = vld [vmem:[%s340 + $0x1b0] sm:$0xff]
        %v477 = vld [vmem:[%s340 + $0x1b8] sm:$0xff]
        %v478 = vld [vmem:[%s340 + $0x1c0] sm:$0xff]
        %v479 = vld [vmem:[%s340 + $0x1c8] sm:$0xff]
        %v480 = vld [vmem:[%s340 + $0x1d0] sm:$0xff]
        %v481 = vld [vmem:[%s340 + $0x1d8] sm:$0xff]
        %v482 = vld [vmem:[%s340 + $0x1e0] sm:$0xff]
        %v483 = vld [vmem:[%s340 + $0x1e8] sm:$0xff]
        %v484 = vld [vmem:[%s340 + $0x1f0] sm:$0xff]
        %v485 = vld [vmem:[%s340 + $0x1f8] sm:$0xff]
        %v486 = vld [vmem:[%s401] sm:$0xf]
        %v488 = vlaneseq
        %v489 = vshrl.u32 %v488, 7
        %v490 = vsub.s32 0, %v489
        %v491 = vrot.slane %v486, %v490
        %v492 = vlaneseq
        %v493 = vshrl.u32 %v492, 7
        %v494 = vsub.s32 1, %v493
        %v495 = vrot.slane %v486, %v494
        %v496 = vlaneseq
        %v497 = vshrl.u32 %v496, 7
        %v498 = vsub.s32 2, %v497
        %v499 = vrot.slane %v486, %v498
        %v500 = vlaneseq
        %v501 = vshrl.u32 %v500, 7
        %v502 = vsub.s32 3, %v501
        %v503 = vrot.slane %v486, %v502
        %v572 = vunpack.c.l.b16 %v422
        %v573 = vunpack.c.h.b16 %v422
        %v574 = vunpack.c.l.b16 %v423
        %v575 = vunpack.c.h.b16 %v423
        %v576 = vunpack.c.l.b16 %v424
        %v577 = vunpack.c.h.b16 %v424
        %v578 = vunpack.c.l.b16 %v425
        %v579 = vunpack.c.h.b16 %v425
        %v580 = vunpack.c.l.b16 %v426
        %v581 = vunpack.c.h.b16 %v426
        %v582 = vunpack.c.l.b16 %v427
        %v583 = vunpack.c.h.b16 %v427
        %v584 = vunpack.c.l.b16 %v428
        %v585 = vunpack.c.h.b16 %v428
        %v586 = vunpack.c.l.b16 %v429
        %v587 = vunpack.c.h.b16 %v429
        %v588 = vunpack.c.l.b16 %v430
        %v589 = vunpack.c.h.b16 %v430
        %v590 = vunpack.c.l.b16 %v431
        %v591 = vunpack.c.h.b16 %v431
        %v592 = vunpack.c.l.b16 %v432
        %v593 = vunpack.c.h.b16 %v432
        %v594 = vunpack.c.l.b16 %v433
        %v595 = vunpack.c.h.b16 %v433
        %v596 = vunpack.c.l.b16 %v434
        %v597 = vunpack.c.h.b16 %v434
        %v598 = vunpack.c.l.b16 %v435
        %v599 = vunpack.c.h.b16 %v435
        %v600 = vunpack.c.l.b16 %v436
        %v601 = vunpack.c.h.b16 %v436
        %v602 = vunpack.c.l.b16 %v437
        %v603 = vunpack.c.h.b16 %v437
        %v604 = vunpack.c.l.b16 %v438
        %v605 = vunpack.c.h.b16 %v438
        %v606 = vunpack.c.l.b16 %v439
        %v607 = vunpack.c.h.b16 %v439
        %v608 = vunpack.c.l.b16 %v440
        %v609 = vunpack.c.h.b16 %v440
        %v610 = vunpack.c.l.b16 %v441
        %v611 = vunpack.c.h.b16 %v441
        %v612 = vunpack.c.l.b16 %v442
        %v613 = vunpack.c.h.b16 %v442
        %v614 = vunpack.c.l.b16 %v443
        %v615 = vunpack.c.h.b16 %v443
        %v616 = vunpack.c.l.b16 %v444
        %v617 = vunpack.c.h.b16 %v444
        %v618 = vunpack.c.l.b16 %v445
        %v619 = vunpack.c.h.b16 %v445
        %v620 = vunpack.c.l.b16 %v446
        %v621 = vunpack.c.h.b16 %v446
        %v622 = vunpack.c.l.b16 %v447
        %v623 = vunpack.c.h.b16 %v447
        %v624 = vunpack.c.l.b16 %v448
        %v625 = vunpack.c.h.b16 %v448
        %v626 = vunpack.c.l.b16 %v449
        %v627 = vunpack.c.h.b16 %v449
        %v628 = vunpack.c.l.b16 %v450
        %v629 = vunpack.c.h.b16 %v450
        %v630 = vunpack.c.l.b16 %v451
        %v631 = vunpack.c.h.b16 %v451
        %v632 = vunpack.c.l.b16 %v452
        %v633 = vunpack.c.h.b16 %v452
        %v634 = vunpack.c.l.b16 %v453
        %v635 = vunpack.c.h.b16 %v453
        %v636 = vunpack.c.l.b16 %v454
        %v637 = vunpack.c.h.b16 %v454
        %v638 = vunpack.c.l.b16 %v455
        %v639 = vunpack.c.h.b16 %v455
        %v640 = vunpack.c.l.b16 %v456
        %v641 = vunpack.c.h.b16 %v456
        %v642 = vunpack.c.l.b16 %v457
        %v643 = vunpack.c.h.b16 %v457
        %v644 = vunpack.c.l.b16 %v458
        %v645 = vunpack.c.h.b16 %v458
        %v646 = vunpack.c.l.b16 %v459
        %v647 = vunpack.c.h.b16 %v459
        %v648 = vunpack.c.l.b16 %v460
        %v649 = vunpack.c.h.b16 %v460
        %v650 = vunpack.c.l.b16 %v461
        %v651 = vunpack.c.h.b16 %v461
        %v652 = vunpack.c.l.b16 %v462
        %v653 = vunpack.c.h.b16 %v462
        %v654 = vunpack.c.l.b16 %v463
        %v655 = vunpack.c.h.b16 %v463
        %v656 = vunpack.c.l.b16 %v464
        %v657 = vunpack.c.h.b16 %v464
        %v658 = vunpack.c.l.b16 %v465
        %v659 = vunpack.c.h.b16 %v465
        %v660 = vunpack.c.l.b16 %v466
        %v661 = vunpack.c.h.b16 %v466
        %v662 = vunpack.c.l.b16 %v467
        %v663 = vunpack.c.h.b16 %v467
        %v664 = vunpack.c.l.b16 %v468
        %v665 = vunpack.c.h.b16 %v468
        %v666 = vunpack.c.l.b16 %v469
        %v667 = vunpack.c.h.b16 %v469
        %v668 = vunpack.c.l.b16 %v470
        %v669 = vunpack.c.h.b16 %v470
        %v670 = vunpack.c.l.b16 %v471
        %v671 = vunpack.c.h.b16 %v471
        %v672 = vunpack.c.l.b16 %v472
        %v673 = vunpack.c.h.b16 %v472
        %v674 = vunpack.c.l.b16 %v473
        %v675 = vunpack.c.h.b16 %v473
        %v676 = vunpack.c.l.b16 %v474
        %v677 = vunpack.c.h.b16 %v474
        %v678 = vunpack.c.l.b16 %v475
        %v679 = vunpack.c.h.b16 %v475
        %v680 = vunpack.c.l.b16 %v476
        %v681 = vunpack.c.h.b16 %v476
        %v682 = vunpack.c.l.b16 %v477
        %v683 = vunpack.c.h.b16 %v477
        %v684 = vunpack.c.l.b16 %v478
        %v685 = vunpack.c.h.b16 %v478
        %v686 = vunpack.c.l.b16 %v479
        %v687 = vunpack.c.h.b16 %v479
        %v688 = vunpack.c.l.b16 %v480
        %v689 = vunpack.c.h.b16 %v480
        %v690 = vunpack.c.l.b16 %v481
        %v691 = vunpack.c.h.b16 %v481
        %v692 = vunpack.c.l.b16 %v482
        %v693 = vunpack.c.h.b16 %v482
        %v694 = vunpack.c.l.b16 %v483
        %v695 = vunpack.c.h.b16 %v483
        %v696 = vunpack.c.l.b16 %v484
        %v697 = vunpack.c.h.b16 %v484
        %v698 = vunpack.c.l.b16 %v485
        %v699 = vunpack.c.h.b16 %v485
        %v700 = vpack.c.b16 %v576, %v572
        %v701 = vpack.c.b16 %v577, %v573
        %v702 = vpack.c.b16 %v578, %v574
        %v703 = vpack.c.b16 %v579, %v575
        %v704 = vpack.c.b16 %v584, %v580
        %v705 = vpack.c.b16 %v585, %v581
        %v706 = vpack.c.b16 %v586, %v582
        %v707 = vpack.c.b16 %v587, %v583
        %v708 = vpack.c.b16 %v592, %v588
        %v709 = vpack.c.b16 %v593, %v589
        %v710 = vpack.c.b16 %v594, %v590
        %v711 = vpack.c.b16 %v595, %v591
        %v712 = vpack.c.b16 %v600, %v596
        %v713 = vpack.c.b16 %v601, %v597
        %v714 = vpack.c.b16 %v602, %v598
        %v715 = vpack.c.b16 %v603, %v599
        %v716 = vpack.c.b16 %v608, %v604
        %v717 = vpack.c.b16 %v609, %v605
        %v718 = vpack.c.b16 %v610, %v606
        %v719 = vpack.c.b16 %v611, %v607
        %v720 = vpack.c.b16 %v616, %v612
        %v721 = vpack.c.b16 %v617, %v613
        %v722 = vpack.c.b16 %v618, %v614
        %v723 = vpack.c.b16 %v619, %v615
        %v724 = vpack.c.b16 %v624, %v620
        %v725 = vpack.c.b16 %v625, %v621
        %v726 = vpack.c.b16 %v626, %v622
        %v727 = vpack.c.b16 %v627, %v623
        %v728 = vpack.c.b16 %v632, %v628
        %v729 = vpack.c.b16 %v633, %v629
        %v730 = vpack.c.b16 %v634, %v630
        %v731 = vpack.c.b16 %v635, %v631
        %v732 = vpack.c.b16 %v640, %v636
        %v733 = vpack.c.b16 %v641, %v637
        %v734 = vpack.c.b16 %v642, %v638
        %v735 = vpack.c.b16 %v643, %v639
        %v736 = vpack.c.b16 %v648, %v644
        %v737 = vpack.c.b16 %v649, %v645
        %v738 = vpack.c.b16 %v650, %v646
        %v739 = vpack.c.b16 %v651, %v647
        %v740 = vpack.c.b16 %v656, %v652
        %v741 = vpack.c.b16 %v657, %v653
        %v742 = vpack.c.b16 %v658, %v654
        %v743 = vpack.c.b16 %v659, %v655
        %v744 = vpack.c.b16 %v664, %v660
        %v745 = vpack.c.b16 %v665, %v661
        %v746 = vpack.c.b16 %v666, %v662
        %v747 = vpack.c.b16 %v667, %v663
        %v748 = vpack.c.b16 %v672, %v668
        %v749 = vpack.c.b16 %v673, %v669
        %v750 = vpack.c.b16 %v674, %v670
        %v751 = vpack.c.b16 %v675, %v671
        %v752 = vpack.c.b16 %v680, %v676
        %v753 = vpack.c.b16 %v681, %v677
        %v754 = vpack.c.b16 %v682, %v678
        %v755 = vpack.c.b16 %v683, %v679
        %v756 = vpack.c.b16 %v688, %v684
        %v757 = vpack.c.b16 %v689, %v685
        %v758 = vpack.c.b16 %v690, %v686
        %v759 = vpack.c.b16 %v691, %v687
        %v760 = vpack.c.b16 %v696, %v692
        %v761 = vpack.c.b16 %v697, %v693
        %v762 = vpack.c.b16 %v698, %v694
        %v763 = vpack.c.b16 %v699, %v695
        %828 = vmatprep.subr.bf16.mxu0 %v701
        %829 = vmatpush1.bf16.msra.mxu0 %v700
        %830 = vmatprep.subr.bf16.mxu0 %v705
        %831 = vmatpush1.bf16.msra.mxu0 %v704
        %832 = vmatprep.subr.bf16.mxu0 %v709
        %833 = vmatpush1.bf16.msra.mxu0 %v708
        %834 = vmatprep.subr.bf16.mxu0 %v713
        %835 = vmatpush1.bf16.msra.mxu0 %v712
        %836 = vmatprep.subr.bf16.mxu0 %v717
        %837 = vmatpush1.bf16.msra.mxu0 %v716
        %838 = vmatprep.subr.bf16.mxu0 %v721
        %839 = vmatpush1.bf16.msra.mxu0 %v720
        %840 = vmatprep.subr.bf16.mxu0 %v725
        %841 = vmatpush1.bf16.msra.mxu0 %v724
        %842 = vmatprep.subr.bf16.mxu0 %v729
        %843 = vmatpush1.bf16.msra.mxu0 %v728
        %844 = vmatprep.subr.bf16.mxu0 %v733
        %845 = vmatpush1.bf16.msra.mxu0 %v732
        %846 = vmatprep.subr.bf16.mxu0 %v737
        %847 = vmatpush1.bf16.msra.mxu0 %v736
        %848 = vmatprep.subr.bf16.mxu0 %v741
        %849 = vmatpush1.bf16.msra.mxu0 %v740
        %850 = vmatprep.subr.bf16.mxu0 %v745
        %851 = vmatpush1.bf16.msra.mxu0 %v744
        %852 = vmatprep.subr.bf16.mxu0 %v749
        %853 = vmatpush1.bf16.msra.mxu0 %v748
        %854 = vmatprep.subr.bf16.mxu0 %v753
        %855 = vmatpush1.bf16.msra.mxu0 %v752
        %856 = vmatprep.subr.bf16.mxu0 %v757
        %857 = vmatpush1.bf16.msra.mxu0 %v756
        %858 = vmatprep.subr.bf16.mxu0 %v761
        %859 = vmatpush1.bf16.msra.mxu0 %v760
        %860 = vmatprep.mubr.bf16.mxu0 %v421
        %861 = vmatmul.mubr.bf16.gmra.mrb[0].mxu0 %v420
        %v862 = vpop.f32.mrb[0].mxu0
        %v863 = vadd.f32 %v491, %v862
        %v864 = vpop.f32.mrb[0].mxu0
        %v865 = vadd.f32 %v495, %v864
        %v866 = vpop.f32.mrb[0].mxu0
        %v867 = vpop.f32.mrb[0].mxu0
        %868 = vdwg.mxu0
        %869 = vmatprep.subr.bf16.mxu0 %v703
        %870 = vmatpush1.bf16.msra.mxu0 %v702
        %871 = vmatprep.subr.bf16.mxu0 %v707
        %872 = vmatpush1.bf16.msra.mxu0 %v706
        %873 = vmatprep.subr.bf16.mxu0 %v711
        %874 = vmatpush1.bf16.msra.mxu0 %v710
        %875 = vmatprep.subr.bf16.mxu0 %v715
        %876 = vmatpush1.bf16.msra.mxu0 %v714
        %877 = vmatprep.subr.bf16.mxu0 %v719
        %878 = vmatpush1.bf16.msra.mxu0 %v718
        %879 = vmatprep.subr.bf16.mxu0 %v723
        %880 = vmatpush1.bf16.msra.mxu0 %v722
        %881 = vmatprep.subr.bf16.mxu0 %v727
        %882 = vmatpush1.bf16.msra.mxu0 %v726
        %883 = vmatprep.subr.bf16.mxu0 %v731
        %884 = vmatpush1.bf16.msra.mxu0 %v730
        %885 = vmatprep.subr.bf16.mxu0 %v735
        %886 = vmatpush1.bf16.msra.mxu0 %v734
        %887 = vmatprep.subr.bf16.mxu0 %v739
        %888 = vmatpush1.bf16.msra.mxu0 %v738
        %889 = vmatprep.subr.bf16.mxu0 %v743
        %890 = vmatpush1.bf16.msra.mxu0 %v742
        %891 = vmatprep.subr.bf16.mxu0 %v747
        %892 = vmatpush1.bf16.msra.mxu0 %v746
        %893 = vmatprep.subr.bf16.mxu0 %v751
        %894 = vmatpush1.bf16.msra.mxu0 %v750
        %895 = vmatprep.subr.bf16.mxu0 %v755
        %896 = vmatpush1.bf16.msra.mxu0 %v754
        %897 = vmatprep.subr.bf16.mxu0 %v759
        %898 = vmatpush1.bf16.msra.mxu0 %v758
        %899 = vmatprep.subr.bf16.mxu0 %v763
        %900 = vmatpush1.bf16.msra.mxu0 %v762
        %901 = vmatprep.mubr.bf16.mxu0 %v421
        %902 = vmatmul.mubr.bf16.gmra.mrb[0].mxu0 %v420
        %v903 = vpop.f32.mrb[0].mxu0
        %v904 = vadd.f32 %v499, %v903
        %v905 = vpop.f32.mrb[0].mxu0
        %v906 = vadd.f32 %v503, %v905
        %v907 = vpop.f32.mrb[0].mxu0
        %v908 = vpop.f32.mrb[0].mxu0
        %909 = vdwg.mxu0
        %v910 = vmul.f32 %v863, 0.5
        %v911 = vtanh.pop %v910
        %v912 = vmul.f32 %v911, 0.5
        %v913 = vadd.f32 %v912, 0.5
        %v914 = vmul.f32 %v865, 0.5
        %v915 = vtanh.pop %v914
        %v916 = vmul.f32 %v915, 0.5
        %v917 = vadd.f32 %v916, 0.5
        %v918 = vtanh.pop %v904
        %v919 = vmul.f32 %v906, 0.5
        %v920 = vtanh.pop %v919
        %v921 = vmul.f32 %v920, 0.5
        %v922 = vadd.f32 %v921, 0.5
        %v923 = vmul.f32 %v917, %v419
        %v924 = vmul.f32 %v913, %v918
        %v925 = vadd.f32 %v923, %v924
        %v926 = vtanh.pop %v925
        %v927 = vmul.f32 %v922, %v926
        %928 = vst [vmem:[%s405] sm:$0xff] %v927
        %929 = vst [vmem:[%s409] sm:$0xff] %v925
        %p930 = scmp.lt.s32.totalorder %s24, 1
        // Predicated region
        $region57: #{decoder_forward.1} parent=47 // pred_check
          %p931 = pneg %p930
        $region58: #{decoder_forward.1} parent=47 // pred_check_branch
          %933 = sbr.rel (%p931) target = $region60
        $region59: #{decoder_forward.1} parent=47 // pred_region
          %934 = vst [vmem:[#allocation2] sm:$0xff] %v927
        $region60: #{decoder_forward.1} parent=47 // pred_fallthru
          _
        %p935 = scmp.eq.s32.totalorder %s24, 1
        // Predicated region
        $region61: #{decoder_forward.1} parent=47 // pred_check
          %p936 = pneg %p935
        $region62: #{decoder_forward.1} parent=47 // pred_check_branch
          %938 = sbr.rel (%p936) target = $region64
        $region63: #{decoder_forward.1} parent=47 // pred_region
          %v939 = vpack.c.bf16 %v927, %v927
          %v940 = vld [vmem:[%s5] sm:$0xf]
          %v941 = vld [vmem:[%s5 + $0x4] sm:$0xf]
          %v942 = vld [vmem:[%s5 + $0x8] sm:$0xf]
          %v943 = vld [vmem:[%s5 + $0xc] sm:$0xf]
          %v944 = vld [vmem:[%s5 + $0x10] sm:$0xf]
          %v945 = vld [vmem:[%s5 + $0x14] sm:$0xf]
          %v946 = vld [vmem:[%s5 + $0x18] sm:$0xf]
          %v947 = vld [vmem:[%s5 + $0x1c] sm:$0xf]
          %v948 = vld [vmem:[%s5 + $0x20] sm:$0xf]
          %v949 = vld [vmem:[%s5 + $0x24] sm:$0xf]
          %v950 = vld [vmem:[%s5 + $0x28] sm:$0xf]
          %v951 = vld [vmem:[%s5 + $0x2c] sm:$0xf]
          %v952 = vld [vmem:[%s5 + $0x30] sm:$0xf]
          %v953 = vld [vmem:[%s5 + $0x34] sm:$0xf]
          %v954 = vld [vmem:[%s5 + $0x38] sm:$0xf]
          %v955 = vld [vmem:[%s5 + $0x3c] sm:$0xf]
          %v956 = vld [vmem:[%s6] sm:$0x1]
          %v958 = vlaneseq
          %v959 = vshrl.u32 %v958, 7
          %v960 = vsub.s32 0, %v959
          %v961 = vrot.slane %v956, %v960
          %v979 = vunpack.c.l.b16 %v940
          %v980 = vunpack.c.l.b16 %v941
          %v981 = vunpack.c.l.b16 %v942
          %v982 = vunpack.c.l.b16 %v943
          %v983 = vunpack.c.l.b16 %v944
          %v984 = vunpack.c.l.b16 %v945
          %v985 = vunpack.c.l.b16 %v946
          %v986 = vunpack.c.l.b16 %v947
          %v987 = vunpack.c.l.b16 %v948
          %v988 = vunpack.c.l.b16 %v949
          %v989 = vunpack.c.l.b16 %v950
          %v990 = vunpack.c.l.b16 %v951
          %v991 = vunpack.c.l.b16 %v952
          %v992 = vunpack.c.l.b16 %v953
          %v993 = vunpack.c.l.b16 %v954
          %v994 = vunpack.c.l.b16 %v955
          %v995 = vpack.c.b16 %v980, %v979
          %v996 = vpack.c.b16 %v982, %v981
          %v997 = vpack.c.b16 %v984, %v983
          %v998 = vpack.c.b16 %v986, %v985
          %v999 = vpack.c.b16 %v988, %v987
          %v1000 = vpack.c.b16 %v990, %v989
          %v1001 = vpack.c.b16 %v992, %v991
          %v1002 = vpack.c.b16 %v994, %v993
          %1011 = vmatprep.subr.bf16.mxu0 0
          %1012 = vmatpush1.bf16.msra.mxu0 %v995
          %1013 = vmatprep.subr.bf16.mxu0 0
          %1014 = vmatpush1.bf16.msra.mxu0 %v996
          %1015 = vmatprep.subr.bf16.mxu0 0
          %1016 = vmatpush1.bf16.msra.mxu0 %v997
          %1017 = vmatprep.subr.bf16.mxu0 0
          %1018 = vmatpush1.bf16.msra.mxu0 %v998
          %1019 = vmatprep.subr.bf16.mxu0 0
          %1020 = vmatpush1.bf16.msra.mxu0 %v999
          %1021 = vmatprep.subr.bf16.mxu0 0
          %1022 = vmatpush1.bf16.msra.mxu0 %v1000
          %1023 = vmatprep.subr.bf16.mxu0 0
          %1024 = vmatpush1.bf16.msra.mxu0 %v1001
          %1025 = vmatprep.subr.bf16.mxu0 0
          %1026 = vmatpush1.bf16.msra.mxu0 %v1002
          %1027 = vmatprep.subr.bf16.mxu0 0
          %1028 = vmatpush1.bf16.msra.mxu0 0
          %1029 = vmatprep.subr.bf16.mxu0 0
          %1030 = vmatpush1.bf16.msra.mxu0 0
          %1031 = vmatprep.subr.bf16.mxu0 0
          %1032 = vmatpush1.bf16.msra.mxu0 0
          %1033 = vmatprep.subr.bf16.mxu0 0
          %1034 = vmatpush1.bf16.msra.mxu0 0
          %1035 = vmatprep.subr.bf16.mxu0 0
          %1036 = vmatpush1.bf16.msra.mxu0 0
          %1037 = vmatprep.subr.bf16.mxu0 0
          %1038 = vmatpush1.bf16.msra.mxu0 0
          %1039 = vmatprep.subr.bf16.mxu0 0
          %1040 = vmatpush1.bf16.msra.mxu0 0
          %1041 = vmatprep.subr.bf16.mxu0 0
          %1042 = vmatpush1.bf16.msra.mxu0 0
          %1043 = vmatprep.mubr.bf16.mxu0 0
          %1044 = vmatmul.mubr.bf16.gmra.mrb[0].mxu0 %v939
          %v1045 = vpop.f32.mrb[0].mxu0
          %v1046 = vadd.f32 %v961, %v1045
          %v1047 = vpop.f32.mrb[0].mxu0
          %v1048 = vpop.f32.mrb[0].mxu0
          %v1049 = vpop.f32.mrb[0].mxu0
          %1050 = vdwg.mxu0
          %1051 = vst [vmem:[%s7] sm:$0xff] %v1046
        $region64: #{decoder_forward.1} parent=47 // pred_fallthru
          _
        %p1052 = scmp.lt.s32.totalorder %s24, 1
        %s1053 = scalar_select %p1052, %s24, 1
        %s1054 = smul.addr %s1053, 8
        %s1055 = scalar_lea.vmem %s8, %s1054
        %p1056 = scmp.lt.s32.totalorder %s24, 1
        %s1057 = scalar_select %p1056, %s24, 1
        %s1058 = smul.addr %s1057, 8
        %s1059 = scalar_lea.vmem %s9, %s1058
        // Predicated region
        $region65: #{decoder_forward.1} parent=47 // pred_check
          %p1060 = pneg %p204
        $region66: #{decoder_forward.1} parent=47 // pred_check_branch
          %1062 = sbr.rel (%p1060) target = $region68
        $region67: #{decoder_forward.1} parent=47 // pred_region
          _
        $region68: #{decoder_forward.1} parent=47 // pred_fallthru
          _
        // Predicated region
        $region69: #{decoder_forward.1} parent=47 // pred_check
          %p1063 = pneg %p230
        $region70: #{decoder_forward.1} parent=47 // pred_check_branch
          %1065 = sbr.rel (%p1063) target = $region72
        $region71: #{decoder_forward.1} parent=47 // pred_region
          _
        $region72: #{decoder_forward.1} parent=47 // pred_fallthru
          _
        // Predicated region
        $region73: #{decoder_forward.1} parent=47 // pred_check
          %p1066 = pneg %p256
        $region74: #{decoder_forward.1} parent=47 // pred_check_branch
          %1068 = sbr.rel (%p1066) target = $region76
        $region75: #{decoder_forward.1} parent=47 // pred_region
          _
        $region76: #{decoder_forward.1} parent=47 // pred_fallthru
          _
        // Predicated region
        $region77: #{decoder_forward.1} parent=47 // pred_check
          %p1069 = pneg %p204
        $region78: #{decoder_forward.1} parent=47 // pred_check_branch
          %1071 = sbr.rel (%p1069) target = $region80
        $region79: #{decoder_forward.1} parent=47 // pred_region
          _
        $region80: #{decoder_forward.1} parent=47 // pred_fallthru
          _
      $region48: #{decoder_forward.1} parent=5 // pred_fallthru
        _
      %p1072 = scmp.le.s32.totalorder 2, %s19
      // Predicated region
      $region81: #{decoder_forward.1} parent=5 // pred_check
        %p1073 = pneg %p1072
      $region82: #{decoder_forward.1} parent=5 // pred_check_branch
        %1075 = sbr.rel (%p1073) target = $region84
      $region83: #{decoder_forward.1} parent=5 // pred_region
        %s1076 = ssub.s32 %s19, 2
        // Predicated region
        $region85: #{decoder_forward.1} parent=83 // pred_check
          %p1077 = pneg %p236
        $region86: #{decoder_forward.1} parent=83 // pred_check_branch
          %1079 = sbr.rel (%p1077) target = $region88
        $region87: #{decoder_forward.1} parent=83 // pred_region
          %p1080 = scmp.lt.s32.totalorder %s25, 1
          %s1081 = scalar_select %p1080, %s25, 1
          %s1082 = smul.addr %s1081, 8
          %s1083 = scalar_lea.vmem %s8, %s1082
        $region88: #{decoder_forward.1} parent=83 // pred_fallthru
          _
        // Predicated region
        $region89: #{decoder_forward.1} parent=83 // pred_check
          %p1084 = pneg %p262
        $region90: #{decoder_forward.1} parent=83 // pred_check_branch
          %1086 = sbr.rel (%p1084) target = $region92
        $region91: #{decoder_forward.1} parent=83 // pred_region
          %p1087 = scmp.lt.s32.totalorder %s25, 1
          %s1088 = scalar_select %p1087, %s25, 1
          %s1089 = smul.addr %s1088, 8
          %s1090 = scalar_lea.vmem %s9, %s1089
        $region92: #{decoder_forward.1} parent=83 // pred_fallthru
          _
      $region84: #{decoder_forward.1} parent=5 // pred_fallthru
        _
    $region6: #{decoder_forward.1} parent=1 // loop_footer
      %s23 = sadd.s32 1, %s19
    $region7: #{decoder_forward.1} parent=1 // loop_footer_branch
      %18 = sbr.rel target = $region3
    $region8: #{decoder_forward.1} parent=1 // loop_exit
      _
    %1091 = vsyncpa [#allocation4], 1
    %s1092 = scalar_lea.sflag [#allocation4], 1
    %1093 = vsyncpa %s1092, 1

</llo_original>
